<compile_context>
chip_gen: v5e
topology: v5e:2x2
jax: 0.10.0
libtpu: 0.0.40
codegen_flags: <defaults>
</compile_context>

<pallas_src>
import jax
import jax.numpy as jnp
from jax.experimental import pallas as pl
from jax.experimental.pallas import tpu as pltpu


def _round_up(x, m):
    return ((x + m - 1) // m) * m


def _pick_f_tile(fk, two_cout):
    """Largest 128-multiple tile dividing fk, capped so the (2*Cout, F_TILE) f32
    accumulator stays within ~16 vregs (16 * 1024 f32 elements)."""
    cap = max(128, ((16 * 1024) // max(two_cout, 1)) // 128 * 128)
    tile = min(fk, 512, cap)
    tile = max(128, (tile // 128) * 128)
    while fk % tile:
        tile -= 128
    return tile


def _spectral_mac_kernel(xs_ref, w1_ref, w2_ref, o_ref):
    # xs_ref: (2*Cin, F)   rows [0:Cin] = Re(x_ft), rows [Cin:2Cin] = Im(x_ft)
    # w1_ref, w2_ref: (Cin, 2*Cout, F)
    # o_ref:  (2*Cout, F)  rows [0:Cout] = Re(out_ft), rows [Cout:2Cout] = Im(out_ft)
    cin = w1_ref.shape[0]
    acc = jnp.zeros(o_ref.shape, jnp.float32)

    if cin <= 8:
        # Small channel counts: statically unrolled.  Every term is a ref-side row
        # load + sublane-broadcast (1, F) * (2*Cout, F) VPU FMA (no XLU traffic).
        for i in range(cin):
            xr_i = xs_ref[i:i + 1, :]                  # (1, F)  Re(x_ft[:, i])
            xi_i = xs_ref[cin + i:cin + i + 1, :]      # (1, F)  Im(x_ft[:, i])
            acc = acc + xr_i * w1_ref[i] + xi_i * w2_ref[i]
    else:
        # Larger channel counts: visible (partially unrolled) loop bounds vreg live
        # ranges and lets the scheduler pipeline the MACs.
        def body(i, a):
            xr_i = xs_ref[pl.ds(i, 1), :]
            xi_i = xs_ref[pl.ds(i + cin, 1), :]
            return a + xr_i * w1_ref[i] + xi_i * w2_ref[i]
        acc = jax.lax.fori_loop(0, cin, body, acc, unroll=4)

    o_ref[...] = acc


def _build_spectral_call(B, cin, two_cin, two_cout, fk, f_tile, single_buffer_weights):
    w_kwargs = {}
    if single_buffer_weights:
        # Constant-index weight blocks: double buffering is pure VMEM waste.
        w_kwargs["pipeline_mode"] = pl.Buffered(1)

    # Frequency outer, batch inner: weight blocks keep the same index across the whole
    # inner batch loop, so they are (re)fetched only when the frequency block changes.
    grid = (fk // f_tile, B)

    in_specs = [
        pl.BlockSpec((None, two_cin, f_tile), lambda f, b: (b, 0, f)),
        pl.BlockSpec((cin, two_cout, f_tile), lambda f, b: (0, 0, f), **w_kwargs),
        pl.BlockSpec((cin, two_cout, f_tile), lambda f, b: (0, 0, f), **w_kwargs),
    ]
    out_specs = pl.BlockSpec((None, two_cout, f_tile), lambda f, b: (b, 0, f))

    # Explicit VMEM budget: above v5e's 16 MiB / v6e-v7x's 32 MiB default scoped limits,
    # never above v7x's 64 MiB physical VMEM.
    w_bufs = 1 if single_buffer_weights else 2
    block_bytes = 4 * f_tile * (2 * two_cin + 2 * two_cout + 2 * w_bufs * cin * two_cout)
    vmem_limit = int(min(max(2 * block_bytes, 32 * 1024 * 1024), 64 * 1024 * 1024))

    return pl.pallas_call(
        _spectral_mac_kernel,
        out_shape=jax.ShapeDtypeStruct((B, two_cout, fk), jnp.float32),
        grid_spec=pltpu.PrefetchScalarGridSpec(
            num_scalar_prefetch=0,
            grid=grid,
            in_specs=in_specs,
            out_specs=out_specs,
        ),
        compiler_params=pltpu.CompilerParams(
            dimension_semantics=("parallel", "parallel"),
            vmem_limit_bytes=vmem_limit,
        ),
    )


_SINGLE_BUFFER_WEIGHTS_OK = True  # flipped to False if this build rejects pl.Buffered(1)


def _compl_mul1d_pallas(xs, w1, w2):
    """xs: (B, 2*Cin, Fk) f32; w1, w2: (Cin, 2*Cout, Fk) f32 -> (B, 2*Cout, Fk) f32."""
    global _SINGLE_BUFFER_WEIGHTS_OK
    B, two_cin, fk = xs.shape
    cin, two_cout, _ = w1.shape
    f_tile = _pick_f_tile(fk, two_cout)

    if _SINGLE_BUFFER_WEIGHTS_OK:
        try:
            call = _build_spectral_call(B, cin, two_cin, two_cout, fk, f_tile, True)
            return call(xs, w1, w2)
        except Exception:
            # pipeline_mode=pl.Buffered(1) unsupported by this JAX/Mosaic build; fall
            # back to default double-buffered weights (still small: modes-only blocks).
            _SINGLE_BUFFER_WEIGHTS_OK = False
    call = _build_spectral_call(B, cin, two_cin, two_cout, fk, f_tile, False)
    return call(xs, w1, w2)


class SpectralConv1d:
    """JAX/Pallas port of the PyTorch SpectralConv1d module."""

    def __init__(self, in_channels, out_channels, modes1, key):
        self.in_channels = in_channels
        self.out_channels = out_channels
        self.modes1 = modes1
        self.scale = 1.0 / (in_channels * out_channels)

        kr, ki = jax.random.split(key)
        # torch.rand(..., dtype=torch.cfloat) draws real & imag uniform in [0, 1).
        self.w_re = self.scale * jax.random.uniform(
            kr, (in_channels, out_channels, modes1), dtype=jnp.float32)
        self.w_im = self.scale * jax.random.uniform(
            ki, (in_channels, out_channels, modes1), dtype=jnp.float32)

        # Kernel-layout weights precomputed once (hoisted out of __call__): pad the
        # frequency axis to a 128-lane multiple and stack so the complex MAC becomes
        # acc += Re(x_i)*w1[i] + Im(x_i)*w2[i] on a (2*Cout, F) tile.
        self.fk = _round_up(modes1, 128)
        pad = ((0, 0), (0, 0), (0, self.fk - modes1))
        w_re_p = jnp.pad(self.w_re, pad)
        w_im_p = jnp.pad(self.w_im, pad)
        self.w1 = jnp.concatenate([w_re_p, w_im_p], axis=1)    # (Cin, 2*Cout, Fk)
        self.w2 = jnp.concatenate([-w_im_p, w_re_p], axis=1)   # (Cin, 2*Cout, Fk)

    def __call__(self, x):
        # x: (B, C_in, N) float32
        B, _, N = x.shape
        cout = self.out_channels
        n_freq = N // 2 + 1
        M = min(self.modes1, n_freq)

        # TODO(synk): rfft / irfft stay in plain JAX -- no Pallas FFT equivalent.
        x_ft = jnp.fft.rfft(x, axis=-1)                 # (B, Cin, n_freq) complex64

        # Only the first M modes are used: stack Re/Im along the channel axis and pad
        # the frequency axis up to the kernel's 128-lane multiple.
        xs = jnp.concatenate(
            [jnp.real(x_ft[:, :, :M]), jnp.imag(x_ft[:, :, :M])],
            axis=1).astype(jnp.float32)                 # (B, 2*Cin, M)
        if self.fk > M:
            xs = jnp.pad(xs, ((0, 0), (0, 0), (0, self.fk - M)))

        out = _compl_mul1d_pallas(xs, self.w1, self.w2)  # (B, 2*Cout, Fk)

        out_ft = jax.lax.complex(out[:, :cout, :M], out[:, cout:, :M])
        if n_freq > M:
            # "out_ft[:, :, modes1:] = 0": cheap zero tail, fused into the irfft input.
            out_ft = jnp.concatenate(
                [out_ft, jnp.zeros((B, cout, n_freq - M), jnp.complex64)], axis=-1)

        y = jnp.fft.irfft(out_ft, n=N, axis=-1)          # (B, Cout, N) float32
        return y.astype(jnp.float32)


def _reference_forward(x, w_re, w_im, modes1):
    """Pure-JAX reference mirroring the PyTorch forward, for validation."""
    B, _, N = x.shape
    n_freq = N // 2 + 1
    x_ft = jnp.fft.rfft(x, axis=-1)
    w = w_re + 1j * w_im
    out_m = jnp.einsum('bix,iox->box', x_ft[:, :, :modes1], w)
    out_ft = jnp.zeros((B, w.shape[1], n_freq), dtype=jnp.complex64)
    out_ft = out_ft.at[:, :, :modes1].set(out_m)
    return jnp.fft.irfft(out_ft, n=N, axis=-1)


if __name__ == "__main__":
    key = jax.random.PRNGKey(0)
    k_x, k_w = jax.random.split(key)

    # Small shapes consistent with the module: batch=2, in=4, out=4, spatial=16, modes=5
    B, Cin, Cout, N, modes1 = 2, 4, 4, 16, 5
    x = jax.random.normal(k_x, (B, Cin, N), dtype=jnp.float32)

    layer = SpectralConv1d(Cin, Cout, modes1, k_w)

    y = jax.block_until_ready(layer(x))

    y_ref = _reference_forward(x, layer.w_re, layer.w_im, modes1)
    assert y.shape == (B, Cout, N)
    assert jnp.allclose(y, y_ref, atol=1e-5, rtol=1e-5), "mismatch vs reference"

    print("KERNEL_OK")
</pallas_src>

<mosaic_0001>
module attributes {stable_mosaic.version = 11 : i64} {
  func.func @_spectral_mac_kernel(%arg0: i32, %arg1: i32, %arg2: memref<1x8x128xf32, #tpu.memory_space<vmem>>, %arg3: memref<4x8x128xf32, #tpu.memory_space<vmem>>, %arg4: memref<4x8x128xf32, #tpu.memory_space<vmem>>, %arg5: memref<1x8x128xf32, #tpu.memory_space<vmem>>) attributes {dimension_semantics = [#tpu.dimension_semantics<parallel>, #tpu.dimension_semantics<parallel>], iteration_bounds = array<i64: 1, 2>, scalar_prefetch = 0 : i64, scratch_operands = 0 : i64, tpu.core_type = #tpu.core_type<tc>, window_params = [{transform_indices = @transform_0, window_bounds = array<i64: 1, 8, 128>}, {pipeline_mode = #tpu.pipeline_mode<synchronous>, transform_indices = @transform_1, window_bounds = array<i64: 4, 8, 128>}, {pipeline_mode = #tpu.pipeline_mode<synchronous>, transform_indices = @transform_2, window_bounds = array<i64: 4, 8, 128>}, {transform_indices = @transform_3, window_bounds = array<i64: 1, 8, 128>}]} {
    %cst = arith.constant 0.000000e+00 : f32
    %0 = vector.broadcast %cst : f32 to vector<8x128xf32>
    %c0 = arith.constant 0 : index
    %c0_0 = arith.constant 0 : index
    %c0_1 = arith.constant 0 : index
    %1 = vector.load %arg2[%c0, %c0_0, %c0_1] : memref<1x8x128xf32, #tpu.memory_space<vmem>>, vector<1x1x128xf32>
    %2 = vector.shape_cast %1 : vector<1x1x128xf32> to vector<1x128xf32>
    %c0_2 = arith.constant 0 : index
    %c4 = arith.constant 4 : index
    %c0_3 = arith.constant 0 : index
    %3 = vector.load %arg2[%c0_2, %c4, %c0_3] : memref<1x8x128xf32, #tpu.memory_space<vmem>>, vector<1x1x128xf32>
    %4 = vector.shape_cast %3 : vector<1x1x128xf32> to vector<1x128xf32>
    %c0_4 = arith.constant 0 : index
    %c0_5 = arith.constant 0 : index
    %c0_6 = arith.constant 0 : index
    %5 = vector.load %arg3[%c0_4, %c0_5, %c0_6] : memref<4x8x128xf32, #tpu.memory_space<vmem>>, vector<1x8x128xf32>
    %6 = vector.shape_cast %5 : vector<1x8x128xf32> to vector<8x128xf32>
    %7 = vector.broadcast %2 : vector<1x128xf32> to vector<8x128xf32>
    %8 = arith.mulf %7, %6 : vector<8x128xf32>
    %9 = arith.addf %0, %8 : vector<8x128xf32>
    %c0_7 = arith.constant 0 : index
    %c0_8 = arith.constant 0 : index
    %c0_9 = arith.constant 0 : index
    %10 = vector.load %arg4[%c0_7, %c0_8, %c0_9] : memref<4x8x128xf32, #tpu.memory_space<vmem>>, vector<1x8x128xf32>
    %11 = vector.shape_cast %10 : vector<1x8x128xf32> to vector<8x128xf32>
    %12 = vector.broadcast %4 : vector<1x128xf32> to vector<8x128xf32>
    %13 = arith.mulf %12, %11 : vector<8x128xf32>
    %14 = arith.addf %9, %13 : vector<8x128xf32>
    %c0_10 = arith.constant 0 : index
    %c1 = arith.constant 1 : index
    %c0_11 = arith.constant 0 : index
    %15 = vector.load %arg2[%c0_10, %c1, %c0_11] : memref<1x8x128xf32, #tpu.memory_space<vmem>>, vector<1x1x128xf32>
    %16 = vector.shape_cast %15 : vector<1x1x128xf32> to vector<1x128xf32>
    %c0_12 = arith.constant 0 : index
    %c5 = arith.constant 5 : index
    %c0_13 = arith.constant 0 : index
    %17 = vector.load %arg2[%c0_12, %c5, %c0_13] : memref<1x8x128xf32, #tpu.memory_space<vmem>>, vector<1x1x128xf32>
    %18 = vector.shape_cast %17 : vector<1x1x128xf32> to vector<1x128xf32>
    %c1_14 = arith.constant 1 : index
    %c0_15 = arith.constant 0 : index
    %c0_16 = arith.constant 0 : index
    %19 = vector.load %arg3[%c1_14, %c0_15, %c0_16] : memref<4x8x128xf32, #tpu.memory_space<vmem>>, vector<1x8x128xf32>
    %20 = vector.shape_cast %19 : vector<1x8x128xf32> to vector<8x128xf32>
    %21 = vector.broadcast %16 : vector<1x128xf32> to vector<8x128xf32>
    %22 = arith.mulf %21, %20 : vector<8x128xf32>
    %23 = arith.addf %14, %22 : vector<8x128xf32>
    %c1_17 = arith.constant 1 : index
    %c0_18 = arith.constant 0 : index
    %c0_19 = arith.constant 0 : index
    %24 = vector.load %arg4[%c1_17, %c0_18, %c0_19] : memref<4x8x128xf32, #tpu.memory_space<vmem>>, vector<1x8x128xf32>
    %25 = vector.shape_cast %24 : vector<1x8x128xf32> to vector<8x128xf32>
    %26 = vector.broadcast %18 : vector<1x128xf32> to vector<8x128xf32>
    %27 = arith.mulf %26, %25 : vector<8x128xf32>
    %28 = arith.addf %23, %27 : vector<8x128xf32>
    %c0_20 = arith.constant 0 : index
    %c2 = arith.constant 2 : index
    %c0_21 = arith.constant 0 : index
    %29 = vector.load %arg2[%c0_20, %c2, %c0_21] : memref<1x8x128xf32, #tpu.memory_space<vmem>>, vector<1x1x128xf32>
    %30 = vector.shape_cast %29 : vector<1x1x128xf32> to vector<1x128xf32>
    %c0_22 = arith.constant 0 : index
    %c6 = arith.constant 6 : index
    %c0_23 = arith.constant 0 : index
    %31 = vector.load %arg2[%c0_22, %c6, %c0_23] : memref<1x8x128xf32, #tpu.memory_space<vmem>>, vector<1x1x128xf32>
    %32 = vector.shape_cast %31 : vector<1x1x128xf32> to vector<1x128xf32>
    %c2_24 = arith.constant 2 : index
    %c0_25 = arith.constant 0 : index
    %c0_26 = arith.constant 0 : index
    %33 = vector.load %arg3[%c2_24, %c0_25, %c0_26] : memref<4x8x128xf32, #tpu.memory_space<vmem>>, vector<1x8x128xf32>
    %34 = vector.shape_cast %33 : vector<1x8x128xf32> to vector<8x128xf32>
    %35 = vector.broadcast %30 : vector<1x128xf32> to vector<8x128xf32>
    %36 = arith.mulf %35, %34 : vector<8x128xf32>
    %37 = arith.addf %28, %36 : vector<8x128xf32>
    %c2_27 = arith.constant 2 : index
    %c0_28 = arith.constant 0 : index
    %c0_29 = arith.constant 0 : index
    %38 = vector.load %arg4[%c2_27, %c0_28, %c0_29] : memref<4x8x128xf32, #tpu.memory_space<vmem>>, vector<1x8x128xf32>
    %39 = vector.shape_cast %38 : vector<1x8x128xf32> to vector<8x128xf32>
    %40 = vector.broadcast %32 : vector<1x128xf32> to vector<8x128xf32>
    %41 = arith.mulf %40, %39 : vector<8x128xf32>
    %42 = arith.addf %37, %41 : vector<8x128xf32>
    %c0_30 = arith.constant 0 : index
    %c3 = arith.constant 3 : index
    %c0_31 = arith.constant 0 : index
    %43 = vector.load %arg2[%c0_30, %c3, %c0_31] : memref<1x8x128xf32, #tpu.memory_space<vmem>>, vector<1x1x128xf32>
    %44 = vector.shape_cast %43 : vector<1x1x128xf32> to vector<1x128xf32>
    %c0_32 = arith.constant 0 : index
    %c7 = arith.constant 7 : index
    %c0_33 = arith.constant 0 : index
    %45 = vector.load %arg2[%c0_32, %c7, %c0_33] : memref<1x8x128xf32, #tpu.memory_space<vmem>>, vector<1x1x128xf32>
    %46 = vector.shape_cast %45 : vector<1x1x128xf32> to vector<1x128xf32>
    %c3_34 = arith.constant 3 : index
    %c0_35 = arith.constant 0 : index
    %c0_36 = arith.constant 0 : index
    %47 = vector.load %arg3[%c3_34, %c0_35, %c0_36] : memref<4x8x128xf32, #tpu.memory_space<vmem>>, vector<1x8x128xf32>
    %48 = vector.shape_cast %47 : vector<1x8x128xf32> to vector<8x128xf32>
    %49 = vector.broadcast %44 : vector<1x128xf32> to vector<8x128xf32>
    %50 = arith.mulf %49, %48 : vector<8x128xf32>
    %51 = arith.addf %42, %50 : vector<8x128xf32>
    %c3_37 = arith.constant 3 : index
    %c0_38 = arith.constant 0 : index
    %c0_39 = arith.constant 0 : index
    %52 = vector.load %arg4[%c3_37, %c0_38, %c0_39] : memref<4x8x128xf32, #tpu.memory_space<vmem>>, vector<1x8x128xf32>
    %53 = vector.shape_cast %52 : vector<1x8x128xf32> to vector<8x128xf32>
    %54 = vector.broadcast %46 : vector<1x128xf32> to vector<8x128xf32>
    %55 = arith.mulf %54, %53 : vector<8x128xf32>
    %56 = arith.addf %51, %55 : vector<8x128xf32>
    %c0_40 = arith.constant 0 : index
    %c0_41 = arith.constant 0 : index
    %c0_42 = arith.constant 0 : index
    %57 = vector.load %arg5[%c0_40, %c0_41, %c0_42] : memref<1x8x128xf32, #tpu.memory_space<vmem>>, vector<1x8x128xf32>
    %58 = vector.shape_cast %57 : vector<1x8x128xf32> to vector<8x128xf32>
    %59 = vector.shape_cast %56 : vector<8x128xf32> to vector<1x8x128xf32>
    tpu.vector_store %arg5[%c0_40, %c0_41, %c0_42], %59 {strides = array<i32>} : memref<1x8x128xf32, #tpu.memory_space<vmem>>, vector<1x8x128xf32>,
    return
  }
  func.func @transform_0(%arg0: i32, %arg1: i32) -> (i32, i32, i32) {
    %c0_i32 = arith.constant 0 : i32
    %c0_i32_0 = arith.constant 0 : i32
    return %arg1, %c0_i32, %arg0 : i32, i32, i32
  }
  func.func @transform_1(%arg0: i32, %arg1: i32) -> (i32, i32, i32) {
    %c0_i32 = arith.constant 0 : i32
    %c0_i32_0 = arith.constant 0 : i32
    %c0_i32_1 = arith.constant 0 : i32
    return %c0_i32, %c0_i32_0, %arg0 : i32, i32, i32
  }
  func.func @transform_2(%arg0: i32, %arg1: i32) -> (i32, i32, i32) {
    %c0_i32 = arith.constant 0 : i32
    %c0_i32_0 = arith.constant 0 : i32
    %c0_i32_1 = arith.constant 0 : i32
    return %c0_i32, %c0_i32_0, %arg0 : i32, i32, i32
  }
  func.func @transform_3(%arg0: i32, %arg1: i32) -> (i32, i32, i32) {
    %c0_i32 = arith.constant 0 : i32
    %c0_i32_0 = arith.constant 0 : i32
    return %arg1, %c0_i32, %arg0 : i32, i32, i32
  }
}

module attributes {stable_mosaic.version = 11 : i64} {
  func.func @_spectral_mac_kernel(%arg0: i32, %arg1: i32, %arg2: memref<1x8x128xf32, #tpu.memory_space<vmem>>, %arg3: memref<4x8x128xf32, #tpu.memory_space<vmem>>, %arg4: memref<4x8x128xf32, #tpu.memory_space<vmem>>, %arg5: memref<1x8x128xf32, #tpu.memory_space<vmem>>) attributes {dimension_semantics = [#tpu.dimension_semantics<parallel>, #tpu.dimension_semantics<parallel>], iteration_bounds = array<i64: 1, 2>, scalar_prefetch = 0 : i64, scratch_operands = 0 : i64, tpu.core_type = #tpu.core_type<tc>, window_params = [{transform_indices = @transform_0, window_bounds = array<i64: 1, 8, 128>}, {transform_indices = @transform_1, window_bounds = array<i64: 4, 8, 128>}, {transform_indices = @transform_2, window_bounds = array<i64: 4, 8, 128>}, {transform_indices = @transform_3, window_bounds = array<i64: 1, 8, 128>}]} {
    %cst = arith.constant 0.000000e+00 : f32
    %0 = vector.broadcast %cst : f32 to vector<8x128xf32>
    %c0 = arith.constant 0 : index
    %c0_0 = arith.constant 0 : index
    %c0_1 = arith.constant 0 : index
    %1 = vector.load %arg2[%c0, %c0_0, %c0_1] : memref<1x8x128xf32, #tpu.memory_space<vmem>>, vector<1x1x128xf32>
    %2 = vector.shape_cast %1 : vector<1x1x128xf32> to vector<1x128xf32>
    %c0_2 = arith.constant 0 : index
    %c4 = arith.constant 4 : index
    %c0_3 = arith.constant 0 : index
    %3 = vector.load %arg2[%c0_2, %c4, %c0_3] : memref<1x8x128xf32, #tpu.memory_space<vmem>>, vector<1x1x128xf32>
    %4 = vector.shape_cast %3 : vector<1x1x128xf32> to vector<1x128xf32>
    %c0_4 = arith.constant 0 : index
    %c0_5 = arith.constant 0 : index
    %c0_6 = arith.constant 0 : index
    %5 = vector.load %arg3[%c0_4, %c0_5, %c0_6] : memref<4x8x128xf32, #tpu.memory_space<vmem>>, vector<1x8x128xf32>
    %6 = vector.shape_cast %5 : vector<1x8x128xf32> to vector<8x128xf32>
    %7 = vector.broadcast %2 : vector<1x128xf32> to vector<8x128xf32>
    %8 = arith.mulf %7, %6 : vector<8x128xf32>
    %9 = arith.addf %0, %8 : vector<8x128xf32>
    %c0_7 = arith.constant 0 : index
    %c0_8 = arith.constant 0 : index
    %c0_9 = arith.constant 0 : index
    %10 = vector.load %arg4[%c0_7, %c0_8, %c0_9] : memref<4x8x128xf32, #tpu.memory_space<vmem>>, vector<1x8x128xf32>
    %11 = vector.shape_cast %10 : vector<1x8x128xf32> to vector<8x128xf32>
    %12 = vector.broadcast %4 : vector<1x128xf32> to vector<8x128xf32>
    %13 = arith.mulf %12, %11 : vector<8x128xf32>
    %14 = arith.addf %9, %13 : vector<8x128xf32>
    %c0_10 = arith.constant 0 : index
    %c1 = arith.constant 1 : index
    %c0_11 = arith.constant 0 : index
    %15 = vector.load %arg2[%c0_10, %c1, %c0_11] : memref<1x8x128xf32, #tpu.memory_space<vmem>>, vector<1x1x128xf32>
    %16 = vector.shape_cast %15 : vector<1x1x128xf32> to vector<1x128xf32>
    %c0_12 = arith.constant 0 : index
    %c5 = arith.constant 5 : index
    %c0_13 = arith.constant 0 : index
    %17 = vector.load %arg2[%c0_12, %c5, %c0_13] : memref<1x8x128xf32, #tpu.memory_space<vmem>>, vector<1x1x128xf32>
    %18 = vector.shape_cast %17 : vector<1x1x128xf32> to vector<1x128xf32>
    %c1_14 = arith.constant 1 : index
    %c0_15 = arith.constant 0 : index
    %c0_16 = arith.constant 0 : index
    %19 = vector.load %arg3[%c1_14, %c0_15, %c0_16] : memref<4x8x128xf32, #tpu.memory_space<vmem>>, vector<1x8x128xf32>
    %20 = vector.shape_cast %19 : vector<1x8x128xf32> to vector<8x128xf32>
    %21 = vector.broadcast %16 : vector<1x128xf32> to vector<8x128xf32>
    %22 = arith.mulf %21, %20 : vector<8x128xf32>
    %23 = arith.addf %14, %22 : vector<8x128xf32>
    %c1_17 = arith.constant 1 : index
    %c0_18 = arith.constant 0 : index
    %c0_19 = arith.constant 0 : index
    %24 = vector.load %arg4[%c1_17, %c0_18, %c0_19] : memref<4x8x128xf32, #tpu.memory_space<vmem>>, vector<1x8x128xf32>
    %25 = vector.shape_cast %24 : vector<1x8x128xf32> to vector<8x128xf32>
    %26 = vector.broadcast %18 : vector<1x128xf32> to vector<8x128xf32>
    %27 = arith.mulf %26, %25 : vector<8x128xf32>
    %28 = arith.addf %23, %27 : vector<8x128xf32>
    %c0_20 = arith.constant 0 : index
    %c2 = arith.constant 2 : index
    %c0_21 = arith.constant 0 : index
    %29 = vector.load %arg2[%c0_20, %c2, %c0_21] : memref<1x8x128xf32, #tpu.memory_space<vmem>>, vector<1x1x128xf32>
    %30 = vector.shape_cast %29 : vector<1x1x128xf32> to vector<1x128xf32>
    %c0_22 = arith.constant 0 : index
    %c6 = arith.constant 6 : index
    %c0_23 = arith.constant 0 : index
    %31 = vector.load %arg2[%c0_22, %c6, %c0_23] : memref<1x8x128xf32, #tpu.memory_space<vmem>>, vector<1x1x128xf32>
    %32 = vector.shape_cast %31 : vector<1x1x128xf32> to vector<1x128xf32>
    %c2_24 = arith.constant 2 : index
    %c0_25 = arith.constant 0 : index
    %c0_26 = arith.constant 0 : index
    %33 = vector.load %arg3[%c2_24, %c0_25, %c0_26] : memref<4x8x128xf32, #tpu.memory_space<vmem>>, vector<1x8x128xf32>
    %34 = vector.shape_cast %33 : vector<1x8x128xf32> to vector<8x128xf32>
    %35 = vector.broadcast %30 : vector<1x128xf32> to vector<8x128xf32>
    %36 = arith.mulf %35, %34 : vector<8x128xf32>
    %37 = arith.addf %28, %36 : vector<8x128xf32>
    %c2_27 = arith.constant 2 : index
    %c0_28 = arith.constant 0 : index
    %c0_29 = arith.constant 0 : index
    %38 = vector.load %arg4[%c2_27, %c0_28, %c0_29] : memref<4x8x128xf32, #tpu.memory_space<vmem>>, vector<1x8x128xf32>
    %39 = vector.shape_cast %38 : vector<1x8x128xf32> to vector<8x128xf32>
    %40 = vector.broadcast %32 : vector<1x128xf32> to vector<8x128xf32>
    %41 = arith.mulf %40, %39 : vector<8x128xf32>
    %42 = arith.addf %37, %41 : vector<8x128xf32>
    %c0_30 = arith.constant 0 : index
    %c3 = arith.constant 3 : index
    %c0_31 = arith.constant 0 : index
    %43 = vector.load %arg2[%c0_30, %c3, %c0_31] : memref<1x8x128xf32, #tpu.memory_space<vmem>>, vector<1x1x128xf32>
    %44 = vector.shape_cast %43 : vector<1x1x128xf32> to vector<1x128xf32>
    %c0_32 = arith.constant 0 : index
    %c7 = arith.constant 7 : index
    %c0_33 = arith.constant 0 : index
    %45 = vector.load %arg2[%c0_32, %c7, %c0_33] : memref<1x8x128xf32, #tpu.memory_space<vmem>>, vector<1x1x128xf32>
    %46 = vector.shape_cast %45 : vector<1x1x128xf32> to vector<1x128xf32>
    %c3_34 = arith.constant 3 : index
    %c0_35 = arith.constant 0 : index
    %c0_36 = arith.constant 0 : index
    %47 = vector.load %arg3[%c3_34, %c0_35, %c0_36] : memref<4x8x128xf32, #tpu.memory_space<vmem>>, vector<1x8x128xf32>
    %48 = vector.shape_cast %47 : vector<1x8x128xf32> to vector<8x128xf32>
    %49 = vector.broadcast %44 : vector<1x128xf32> to vector<8x128xf32>
    %50 = arith.mulf %49, %48 : vector<8x128xf32>
    %51 = arith.addf %42, %50 : vector<8x128xf32>
    %c3_37 = arith.constant 3 : index
    %c0_38 = arith.constant 0 : index
    %c0_39 = arith.constant 0 : index
    %52 = vector.load %arg4[%c3_37, %c0_38, %c0_39] : memref<4x8x128xf32, #tpu.memory_space<vmem>>, vector<1x8x128xf32>
    %53 = vector.shape_cast %52 : vector<1x8x128xf32> to vector<8x128xf32>
    %54 = vector.broadcast %46 : vector<1x128xf32> to vector<8x128xf32>
    %55 = arith.mulf %54, %53 : vector<8x128xf32>
    %56 = arith.addf %51, %55 : vector<8x128xf32>
    %c0_40 = arith.constant 0 : index
    %c0_41 = arith.constant 0 : index
    %c0_42 = arith.constant 0 : index
    %57 = vector.load %arg5[%c0_40, %c0_41, %c0_42] : memref<1x8x128xf32, #tpu.memory_space<vmem>>, vector<1x8x128xf32>
    %58 = vector.shape_cast %57 : vector<1x8x128xf32> to vector<8x128xf32>
    %59 = vector.shape_cast %56 : vector<8x128xf32> to vector<1x8x128xf32>
    tpu.vector_store %arg5[%c0_40, %c0_41, %c0_42], %59 {strides = array<i32>} : memref<1x8x128xf32, #tpu.memory_space<vmem>>, vector<1x8x128xf32>,
    return
  }
  func.func @transform_0(%arg0: i32, %arg1: i32) -> (i32, i32, i32) {
    %c0_i32 = arith.constant 0 : i32
    %c0_i32_0 = arith.constant 0 : i32
    return %arg1, %c0_i32, %arg0 : i32, i32, i32
  }
  func.func @transform_1(%arg0: i32, %arg1: i32) -> (i32, i32, i32) {
    %c0_i32 = arith.constant 0 : i32
    %c0_i32_0 = arith.constant 0 : i32
    %c0_i32_1 = arith.constant 0 : i32
    return %c0_i32, %c0_i32_0, %arg0 : i32, i32, i32
  }
  func.func @transform_2(%arg0: i32, %arg1: i32) -> (i32, i32, i32) {
    %c0_i32 = arith.constant 0 : i32
    %c0_i32_0 = arith.constant 0 : i32
    %c0_i32_1 = arith.constant 0 : i32
    return %c0_i32, %c0_i32_0, %arg0 : i32, i32, i32
  }
  func.func @transform_3(%arg0: i32, %arg1: i32) -> (i32, i32, i32) {
    %c0_i32 = arith.constant 0 : i32
    %c0_i32_0 = arith.constant 0 : i32
    return %arg1, %c0_i32, %arg0 : i32, i32, i32
  }
}

</mosaic_0001>

<llo_original>
// kernel: tpu_custom_call.1
$region0: #{tpu_custom_call.1}
  #allocation0 [shape = 'u32[]', space=smem, size = 0x4, offset = 0x4, fixed_abs, tag = 'smem constant byte address 0x4 - core index']
  #allocation1 [shape = 'u32[72,128]{1,0:T(1,128)}', space=vmem, size = 0x9000, scoped, tag = 'internal scratch']
  %s0 = inlined_call_operand.hbm [shape: f32[2,8,128], index: 0, kind: input, shape index: {}]
  %s1 = inlined_call_operand.hbm [shape: f32[4,8,128], index: 1, kind: input, shape index: {}]
  %s2 = inlined_call_operand.hbm [shape: f32[4,8,128], index: 2, kind: input, shape index: {}]
  %s3 = inlined_call_operand.hbm [shape: f32[2,8,128], index: 3, kind: output, shape index: {}]
  %s4 = sld [smem:[#allocation0]]
  $region57: #{tpu_custom_call.1} parent=0
    _
  %s6 = ssub.s32 1, %s4
  %s7 = scalar_select 0, %s6, %s4
  $region1: #{tpu_custom_call.1} parent=0
    #allocation2 [shape = 'u8[8192]{0}', space=vmem, size = 0x2000, scoped, tag = 'input window, operand 0']
    #allocation3 [shape = 's32[2]{0}', space=sflag, size = 0x8, scoped, tag = 'scoped memory for tpu_custom_call.1']
    #allocation4 [shape = 's32[2]{0}', space=sflag, size = 0x8, scoped, tag = 'scoped memory for tpu_custom_call.1']
    #allocation5 [shape = 'u8[16384]{0}', space=vmem, size = 0x4000, scoped, tag = 'input window, operand 1, single buffered']
    #allocation6 [shape = 's32[1]{0}', space=sflag, size = 0x4, scoped, tag = 'scoped memory for tpu_custom_call.1']
    #allocation7 [shape = 'u8[16384]{0}', space=vmem, size = 0x4000, scoped, tag = 'input window, operand 2, single buffered']
    #allocation8 [shape = 'u8[8192]{0}', space=vmem, size = 0x2000, scoped, tag = 'output window, operand 0']
    %8 = vsyncpa [#allocation3], 0
    %s9 = scalar_lea.sflag [#allocation3], 1
    %10 = vsyncpa %s9, 0
    %11 = vsyncpa [#allocation6], 0
    %12 = vsyncpa [#allocation4], 0
    %s13 = scalar_lea.sflag [#allocation4], 1
    %14 = vsyncpa %s13, 0
    loop: start=0, step=1, limit=4
    $region2: #{tpu_custom_call.1} parent=1 // loop_pre_header
      _
    $region3: #{tpu_custom_call.1} parent=1 // loop_header
      %s16 = sphi 0, %s20
      %p17 = scmp.ge.s32.totalorder %s16, 4
      %s23 = sphi 0, %s35
      %s24 = sphi 0, %s31
      %s25 = sphi 0, %s23
      %s26 = sphi 0, %s24
      %s27 = sphi 0, %s25
      %s28 = sphi 0, %s26
      %s40 = sphi 0, %s42
      %s43 = sphi 0, %s40
      %s44 = sphi 0, %s43
      %s60 = sphi 0, %s44
      %s66 = sphi 0, %s68
      %s69 = sphi 0, %s66
      %s70 = sphi 0, %s69
      %s86 = sphi 0, %s70
      %s92 = sphi 0, %s94
      %s95 = sphi 0, %s92
      %s96 = sphi 0, %s95
      %s112 = sphi 0, %s96
      %s120 = sphi 0, %s122
      %s123 = sphi 0, %s120
      %s124 = sphi 0, %s123
      %s140 = sphi 0, %s124
    $region4: #{tpu_custom_call.1} parent=1 // loop_header_branch
      %19 = sbr.rel (%p17) target = $region8
    $region5: #{tpu_custom_call.1} parent=1 // loop_body
      %s21 = ssub.s32 %s16, 1
      %s22 = ssub.s32 %s16, 2
      %s29 = sadd.s32 1, %s24
      %p30 = scmp.ge.s32.totalorder %s29, 2
      %s31 = scalar_select %p30, 0, %s29
      %s32 = sadd.s32 1, %s23
      %s33 = scalar_select %p30, %s32, %s23
      %p34 = scmp.ge.s32.totalorder %s33, 1
      %s35 = scalar_select %p34, 0, %s33
      %s36 = ssub.s32 %s24, %s31
      %s37 = ssub.s32 %s23, %s35
      %s38 = sor.u32 %s36, %s37
      %p39 = scmp.eq.s32.totalorder %s38, 0
      %s41 = sadd.s32 %s40, 1
      %s42 = scalar_select %p39, %s40, %s41
      %p45 = pneg %p39
      %p46 = scmp.eq.s32.totalorder %s16, 1
      %p47 = por %p45, %p46
      %p48 = scmp.ne.s32.totalorder %s40, %s43
      %p49 = scmp.eq.s32.totalorder %s16, 0
      %p50 = por %p48, %p49
      %p51 = scmp.ne.s32.totalorder %s40, %s43
      %p52 = scmp.eq.s32.totalorder %s21, 1
      %p53 = por %p51, %p52
      %p54 = scmp.ne.s32.totalorder %s43, %s44
      %p55 = scmp.eq.s32.totalorder %s21, 0
      %p56 = por %p54, %p55
      %p57 = scmp.ne.s32.totalorder %s43, %s44
      %p58 = scmp.eq.s32.totalorder %s22, 1
      %p59 = por %p57, %p58
      %p61 = scmp.ne.s32.totalorder %s44, %s60
      %p62 = scmp.eq.s32.totalorder %s22, 0
      %p63 = por %p61, %p62
      %s64 = ssub.s32 %s23, %s35
      %p65 = scmp.eq.s32.totalorder %s64, 0
      %s67 = sadd.s32 %s66, 1
      %s68 = scalar_select %p65, %s66, %s67
      %p71 = pneg %p65
      %p72 = scmp.eq.s32.totalorder %s16, 1
      %p73 = por %p71, %p72
      %p74 = scmp.ne.s32.totalorder %s66, %s69
      %p75 = scmp.eq.s32.totalorder %s16, 0
      %p76 = por %p74, %p75
      %p77 = scmp.ne.s32.totalorder %s66, %s69
      %p78 = scmp.eq.s32.totalorder %s21, 1
      %p79 = por %p77, %p78
      %p80 = scmp.ne.s32.totalorder %s69, %s70
      %p81 = scmp.eq.s32.totalorder %s21, 0
      %p82 = por %p80, %p81
      %p83 = scmp.ne.s32.totalorder %s69, %s70
      %p84 = scmp.eq.s32.totalorder %s22, 1
      %p85 = por %p83, %p84
      %p87 = scmp.ne.s32.totalorder %s70, %s86
      %p88 = scmp.eq.s32.totalorder %s22, 0
      %p89 = por %p87, %p88
      %s90 = ssub.s32 %s23, %s35
      %p91 = scmp.eq.s32.totalorder %s90, 0
      %s93 = sadd.s32 %s92, 1
      %s94 = scalar_select %p91, %s92, %s93
      %p97 = pneg %p91
      %p98 = scmp.eq.s32.totalorder %s16, 1
      %p99 = por %p97, %p98
      %p100 = scmp.ne.s32.totalorder %s92, %s95
      %p101 = scmp.eq.s32.totalorder %s16, 0
      %p102 = por %p100, %p101
      %p103 = scmp.ne.s32.totalorder %s92, %s95
      %p104 = scmp.eq.s32.totalorder %s21, 1
      %p105 = por %p103, %p104
      %p106 = scmp.ne.s32.totalorder %s95, %s96
      %p107 = scmp.eq.s32.totalorder %s21, 0
      %p108 = por %p106, %p107
      %p109 = scmp.ne.s32.totalorder %s95, %s96
      %p110 = scmp.eq.s32.totalorder %s22, 1
      %p111 = por %p109, %p110
      %p113 = scmp.ne.s32.totalorder %s96, %s112
      %p114 = scmp.eq.s32.totalorder %s22, 0
      %p115 = por %p113, %p114
      %s116 = ssub.s32 %s24, %s31
      %s117 = ssub.s32 %s23, %s35
      %s118 = sor.u32 %s116, %s117
      %p119 = scmp.eq.s32.totalorder %s118, 0
      %s121 = sadd.s32 %s120, 1
      %s122 = scalar_select %p119, %s120, %s121
      %p125 = pneg %p119
      %p126 = scmp.eq.s32.totalorder %s16, 1
      %p127 = por %p125, %p126
      %p128 = scmp.ne.s32.totalorder %s120, %s123
      %p129 = scmp.eq.s32.totalorder %s16, 0
      %p130 = por %p128, %p129
      %p131 = scmp.ne.s32.totalorder %s120, %s123
      %p132 = scmp.eq.s32.totalorder %s21, 1
      %p133 = por %p131, %p132
      %p134 = scmp.ne.s32.totalorder %s123, %s124
      %p135 = scmp.eq.s32.totalorder %s21, 0
      %p136 = por %p134, %p135
      %p137 = scmp.ne.s32.totalorder %s123, %s124
      %p138 = scmp.eq.s32.totalorder %s22, 1
      %p139 = por %p137, %p138
      %p141 = scmp.ne.s32.totalorder %s124, %s140
      %p142 = scmp.eq.s32.totalorder %s22, 0
      %p143 = por %p141, %p142
      %p144 = scmp.le.s32.totalorder 1, %s16
      %p145 = scmp.lt.s32.totalorder %s16, 3
      %p146 = pnand %p144, %p145
      %p147 = pneg %p146
      // Predicated region
      $region9: #{tpu_custom_call.1} parent=5 // pred_check
        _
      $region10: #{tpu_custom_call.1} parent=5 // pred_check_branch
        %149 = sbr.rel (%p146) target = $region12
      $region11: #{tpu_custom_call.1} parent=5 // pred_region
        %s150 = ssub.s32 %s16, 1
        // Predicated region
        $region13: #{tpu_custom_call.1} parent=11 // pred_check
          %p151 = pneg %p82
        $region14: #{tpu_custom_call.1} parent=11 // pred_check_branch
          %153 = sbr.rel (%p151) target = $region16
        $region15: #{tpu_custom_call.1} parent=11 // pred_region
          %155 = vsyncadd [#allocation6], 0
          %s156 = smul.addr %s25, 8
          %s157 = scalar_lea.hbm %s1, %s156
          %s158 = sshll.u32 %s157, 4
          %s159 = int_to_ptr.hbm [resolvable:$true] %s158
          %s160 = sshll.u32 [#allocation5], 4
          %s161 = int_to_ptr.vmem [resolvable:$true] %s160
          %166 = dma.hbm_to_vmem [thread:$0]  %s159, 512, %s161, [#allocation6], 128, 128, 8
        $region16: #{tpu_custom_call.1} parent=11 // pred_fallthru
          _
        // Predicated region
        $region17: #{tpu_custom_call.1} parent=11 // pred_check
          %p167 = pneg %p108
        $region18: #{tpu_custom_call.1} parent=11 // pred_check_branch
          %169 = sbr.rel (%p167) target = $region20
        $region19: #{tpu_custom_call.1} parent=11 // pred_region
          %171 = vsyncadd [#allocation6], 0
          %s172 = smul.addr %s25, 8
          %s173 = scalar_lea.hbm %s2, %s172
          %s174 = sshll.u32 %s173, 4
          %s175 = int_to_ptr.hbm [resolvable:$true] %s174
          %s176 = sshll.u32 [#allocation7], 4
          %s177 = int_to_ptr.vmem [resolvable:$true] %s176
          %182 = dma.hbm_to_vmem [thread:$0]  %s175, 512, %s177, [#allocation6], 128, 128, 8
        $region20: #{tpu_custom_call.1} parent=11 // pred_fallthru
          _
      $region12: #{tpu_custom_call.1} parent=5 // pred_fallthru
        _
      %p183 = scmp.lt.s32.totalorder %s16, 2
      // Predicated region
      $region21: #{tpu_custom_call.1} parent=5 // pred_check
        %p184 = pneg %p183
      $region22: #{tpu_custom_call.1} parent=5 // pred_check_branch
        %186 = sbr.rel (%p184) target = $region24
      $region23: #{tpu_custom_call.1} parent=5 // pred_region
        // Predicated region
        $region25: #{tpu_custom_call.1} parent=23 // pred_check
          %p187 = pneg %p50
        $region26: #{tpu_custom_call.1} parent=23 // pred_check_branch
          %189 = sbr.rel (%p187) target = $region28
        $region27: #{tpu_custom_call.1} parent=23 // pred_region
          %s190 = sand.u32 %s40, 1
          %s191 = scalar_lea.sflag [#allocation3], %s190
          %s192 = sand.u32 %s40, 1
          %s193 = smul.addr %s192, 8
          %s194 = scalar_lea.vmem [#allocation2], %s193
          %196 = vsyncadd %s191, 0
          %s197 = sadd.s32 %s23, %s24
          %s198 = smul.addr %s197, 8
          %s199 = scalar_lea.hbm %s0, %s198
          %s201 = sshll.u32 %s199, 4
          %s202 = int_to_ptr.hbm [resolvable:$true] %s201
          %s203 = sshll.u32 %s194, 4
          %s204 = int_to_ptr.vmem [resolvable:$true] %s203
          %206 = dma.hbm_to_vmem [thread:$0]  %s202, 128, %s204, %s191
        $region28: #{tpu_custom_call.1} parent=23 // pred_fallthru
          _
      $region24: #{tpu_custom_call.1} parent=5 // pred_fallthru
        _
      %p207 = scmp.le.s32.totalorder 1, %s16
      %p208 = scmp.lt.s32.totalorder %s16, 3
      %p209 = pnand %p207, %p208
      %p210 = pneg %p209
      // Predicated region
      $region29: #{tpu_custom_call.1} parent=5 // pred_check
        _
      $region30: #{tpu_custom_call.1} parent=5 // pred_check_branch
        %212 = sbr.rel (%p209) target = $region32
      $region31: #{tpu_custom_call.1} parent=5 // pred_region
        %s213 = ssub.s32 %s16, 1
        %s214 = sand.u32 %s43, 1
        %s215 = scalar_lea.sflag [#allocation3], %s214
        %s216 = sand.u32 %s43, 1
        %s217 = smul.addr %s216, 8
        %s218 = scalar_lea.vmem [#allocation2], %s217
        // Predicated region
        $region33: #{tpu_custom_call.1} parent=31 // pred_check
          %p219 = pneg %p56
        $region34: #{tpu_custom_call.1} parent=31 // pred_check_branch
          %221 = sbr.rel (%p219) target = $region36
        $region35: #{tpu_custom_call.1} parent=31 // pred_region
          %223 = dma.done %s215, 128
        $region36: #{tpu_custom_call.1} parent=31 // pred_fallthru
          _
        // Predicated region
        $region37: #{tpu_custom_call.1} parent=31 // pred_check
          %p224 = pneg %p82
        $region38: #{tpu_custom_call.1} parent=31 // pred_check_branch
          %226 = sbr.rel (%p224) target = $region40
        $region39: #{tpu_custom_call.1} parent=31 // pred_region
          %228 = dma.done [#allocation6], 512
        $region40: #{tpu_custom_call.1} parent=31 // pred_fallthru
          _
        // Predicated region
        $region41: #{tpu_custom_call.1} parent=31 // pred_check
          %p229 = pneg %p108
        $region42: #{tpu_custom_call.1} parent=31 // pred_check_branch
          %231 = sbr.rel (%p229) target = $region44
        $region43: #{tpu_custom_call.1} parent=31 // pred_region
          %233 = dma.done [#allocation6], 512
        $region44: #{tpu_custom_call.1} parent=31 // pred_fallthru
          _
        %s234 = sand.u32 %s43, 1
        %s235 = scalar_lea.sflag [#allocation3], %s234
        %s236 = sand.u32 %s43, 1
        %s237 = smul.addr %s236, 8
        %s238 = scalar_lea.vmem [#allocation2], %s237
        %p239 = pneg %p56
        %p240 = pneg %p53
        %p241 = pneg %p82
        %p242 = pneg %p79
        %p243 = pneg %p108
        %p244 = pneg %p105
        %p245 = pneg %p136
        %p246 = pneg %p133
        %s247 = sand.u32 %s123, 1
        %s248 = scalar_lea.sflag [#allocation4], %s247
        %s249 = sand.u32 %s123, 1
        %s250 = smul.addr %s249, 8
        %s251 = scalar_lea.vmem [#allocation8], %s250
        %v252 = vld [vmem:[%s218] sm:$0x1]
        %v253 = vld [vmem:[%s218 + $0x4] sm:$0x1]
        %v254 = vld [vmem:[#allocation5] sm:$0xff]
        %v255 = vperm.slane %v252, 0
        %v256 = vmul.f32 %v255, %v254
        %v257 = vadd.f32 %v256, 0.0
        %v258 = vld [vmem:[#allocation7] sm:$0xff]
        %v259 = vperm.slane %v253, 0
        %v260 = vmul.f32 %v259, %v258
        %v261 = vadd.f32 %v257, %v260
        %v262 = vld [vmem:[%s218 + $0x1] sm:$0x1]
        %v263 = vld [vmem:[%s218 + $0x5] sm:$0x1]
        %s264 = scalar_lea.vmem [#allocation5], 8
        %v265 = vld [vmem:[%s264] sm:$0xff]
        %v266 = vperm.slane %v262, 0
        %v267 = vmul.f32 %v266, %v265
        %v268 = vadd.f32 %v261, %v267
        %s269 = scalar_lea.vmem [#allocation7], 8
        %v270 = vld [vmem:[%s269] sm:$0xff]
        %v271 = vperm.slane %v263, 0
        %v272 = vmul.f32 %v271, %v270
        %v273 = vadd.f32 %v268, %v272
        %v274 = vld [vmem:[%s218 + $0x2] sm:$0x1]
        %v275 = vld [vmem:[%s218 + $0x6] sm:$0x1]
        %s276 = scalar_lea.vmem [#allocation5], 16
        %v277 = vld [vmem:[%s276] sm:$0xff]
        %v278 = vperm.slane %v274, 0
        %v279 = vmul.f32 %v278, %v277
        %v280 = vadd.f32 %v273, %v279
        %s281 = scalar_lea.vmem [#allocation7], 16
        %v282 = vld [vmem:[%s281] sm:$0xff]
        %v283 = vperm.slane %v275, 0
        %v284 = vmul.f32 %v283, %v282
        %v285 = vadd.f32 %v280, %v284
        %v286 = vld [vmem:[%s218 + $0x3] sm:$0x1]
        %v287 = vld [vmem:[%s218 + $0x7] sm:$0x1]
        %s288 = scalar_lea.vmem [#allocation5], 24
        %v289 = vld [vmem:[%s288] sm:$0xff]
        %v290 = vperm.slane %v286, 0
        %v291 = vmul.f32 %v290, %v289
        %v292 = vadd.f32 %v285, %v291
        %s293 = scalar_lea.vmem [#allocation7], 24
        %v294 = vld [vmem:[%s293] sm:$0xff]
        %v295 = vperm.slane %v287, 0
        %v296 = vmul.f32 %v295, %v294
        %v297 = vadd.f32 %v292, %v296
        %298 = vst [vmem:[%s251] sm:$0xff] %v297
        %s299 = sand.u32 %s123, 1
        %s300 = scalar_lea.sflag [#allocation4], %s299
        %s301 = sand.u32 %s123, 1
        %s302 = smul.addr %s301, 8
        %s303 = scalar_lea.vmem [#allocation8], %s302
        // Predicated region
        $region45: #{tpu_custom_call.1} parent=31 // pred_check
          %p304 = pneg %p133
        $region46: #{tpu_custom_call.1} parent=31 // pred_check_branch
          %306 = sbr.rel (%p304) target = $region48
        $region47: #{tpu_custom_call.1} parent=31 // pred_region
          %308 = vsyncadd %s300, 0
          %s309 = sadd.s32 %s25, %s26
          %s310 = smul.addr %s309, 8
          %s311 = scalar_lea.hbm %s3, %s310
          %s313 = sshll.u32 %s303, 4
          %s314 = int_to_ptr.vmem [resolvable:$true] %s313
          %s315 = sshll.u32 %s311, 4
          %s316 = int_to_ptr.hbm [resolvable:$true] %s315
          %318 = dma.vmem_to_hbm [thread:$0]  %s314, 128, %s316, %s300
        $region48: #{tpu_custom_call.1} parent=31 // pred_fallthru
          _
      $region32: #{tpu_custom_call.1} parent=5 // pred_fallthru
        _
      %p319 = scmp.le.s32.totalorder 2, %s16
      // Predicated region
      $region49: #{tpu_custom_call.1} parent=5 // pred_check
        %p320 = pneg %p319
      $region50: #{tpu_custom_call.1} parent=5 // pred_check_branch
        %322 = sbr.rel (%p320) target = $region52
      $region51: #{tpu_custom_call.1} parent=5 // pred_region
        %s323 = ssub.s32 %s16, 2
        // Predicated region
        $region53: #{tpu_custom_call.1} parent=51 // pred_check
          %p324 = pneg %p139
        $region54: #{tpu_custom_call.1} parent=51 // pred_check_branch
          %326 = sbr.rel (%p324) target = $region56
        $region55: #{tpu_custom_call.1} parent=51 // pred_region
          %s327 = sand.u32 %s124, 1
          %s328 = scalar_lea.sflag [#allocation4], %s327
          %s329 = sand.u32 %s124, 1
          %s330 = smul.addr %s329, 8
          %s331 = scalar_lea.vmem [#allocation8], %s330
          %333 = dma.done %s328, 128
        $region56: #{tpu_custom_call.1} parent=51 // pred_fallthru
          _
      $region52: #{tpu_custom_call.1} parent=5 // pred_fallthru
        _
    $region6: #{tpu_custom_call.1} parent=1 // loop_footer
      %s20 = sadd.s32 1, %s16
    $region7: #{tpu_custom_call.1} parent=1 // loop_footer_branch
      %15 = sbr.rel target = $region3
    $region8: #{tpu_custom_call.1} parent=1 // loop_exit
      _
    %334 = vsyncpa [#allocation3], 1
    %s335 = scalar_lea.sflag [#allocation3], 1
    %336 = vsyncpa %s335, 1
    %337 = vsyncpa [#allocation6], 1
    %338 = vsyncpa [#allocation4], 1
    %s339 = scalar_lea.sflag [#allocation4], 1
    %340 = vsyncpa %s339, 1

// kernel: tpu_custom_call.1
$region0: #{tpu_custom_call.1}
  #allocation0 [shape = 'u32[]', space=smem, size = 0x4, offset = 0x4, fixed_abs, tag = 'smem constant byte address 0x4 - core index']
  #allocation1 [shape = 'u32[72,128]{1,0:T(1,128)}', space=vmem, size = 0x9000, scoped, tag = 'internal scratch']
  %s0 = inlined_call_operand.hbm [shape: f32[2,8,128], index: 0, kind: input, shape index: {}]
  %s1 = inlined_call_operand.hbm [shape: f32[4,8,128], index: 1, kind: input, shape index: {}]
  %s2 = inlined_call_operand.hbm [shape: f32[4,8,128], index: 2, kind: input, shape index: {}]
  %s3 = inlined_call_operand.hbm [shape: f32[2,8,128], index: 3, kind: output, shape index: {}]
  %s4 = sld [smem:[#allocation0]]
  $region57: #{tpu_custom_call.1} parent=0
    _
  %s6 = ssub.s32 1, %s4
  %s7 = scalar_select 0, %s6, %s4
  $region1: #{tpu_custom_call.1} parent=0
    #allocation2 [shape = 'u8[8192]{0}', space=vmem, size = 0x2000, scoped, tag = 'input window, operand 0']
    #allocation3 [shape = 's32[2]{0}', space=sflag, size = 0x8, scoped, tag = 'scoped memory for tpu_custom_call.1']
    #allocation4 [shape = 's32[2]{0}', space=sflag, size = 0x8, scoped, tag = 'scoped memory for tpu_custom_call.1']
    #allocation5 [shape = 'u8[16384]{0}', space=vmem, size = 0x4000, scoped, tag = 'input window, operand 1, single buffered']
    #allocation6 [shape = 's32[1]{0}', space=sflag, size = 0x4, scoped, tag = 'scoped memory for tpu_custom_call.1']
    #allocation7 [shape = 'u8[16384]{0}', space=vmem, size = 0x4000, scoped, tag = 'input window, operand 2, single buffered']
    #allocation8 [shape = 'u8[8192]{0}', space=vmem, size = 0x2000, scoped, tag = 'output window, operand 0']
    %8 = vsyncpa [#allocation3], 0
    %s9 = scalar_lea.sflag [#allocation3], 1
    %10 = vsyncpa %s9, 0
    %11 = vsyncpa [#allocation6], 0
    %12 = vsyncpa [#allocation4], 0
    %s13 = scalar_lea.sflag [#allocation4], 1
    %14 = vsyncpa %s13, 0
    loop: start=0, step=1, limit=4
    $region2: #{tpu_custom_call.1} parent=1 // loop_pre_header
      _
    $region3: #{tpu_custom_call.1} parent=1 // loop_header
      %s16 = sphi 0, %s20
      %p17 = scmp.ge.s32.totalorder %s16, 4
      %s23 = sphi 0, %s35
      %s24 = sphi 0, %s31
      %s25 = sphi 0, %s23
      %s26 = sphi 0, %s24
      %s27 = sphi 0, %s25
      %s28 = sphi 0, %s26
      %s40 = sphi 0, %s42
      %s43 = sphi 0, %s40
      %s44 = sphi 0, %s43
      %s60 = sphi 0, %s44
      %s66 = sphi 0, %s68
      %s69 = sphi 0, %s66
      %s70 = sphi 0, %s69
      %s86 = sphi 0, %s70
      %s92 = sphi 0, %s94
      %s95 = sphi 0, %s92
      %s96 = sphi 0, %s95
      %s112 = sphi 0, %s96
      %s120 = sphi 0, %s122
      %s123 = sphi 0, %s120
      %s124 = sphi 0, %s123
      %s140 = sphi 0, %s124
    $region4: #{tpu_custom_call.1} parent=1 // loop_header_branch
      %19 = sbr.rel (%p17) target = $region8
    $region5: #{tpu_custom_call.1} parent=1 // loop_body
      %s21 = ssub.s32 %s16, 1
      %s22 = ssub.s32 %s16, 2
      %s29 = sadd.s32 1, %s24
      %p30 = scmp.ge.s32.totalorder %s29, 2
      %s31 = scalar_select %p30, 0, %s29
      %s32 = sadd.s32 1, %s23
      %s33 = scalar_select %p30, %s32, %s23
      %p34 = scmp.ge.s32.totalorder %s33, 1
      %s35 = scalar_select %p34, 0, %s33
      %s36 = ssub.s32 %s24, %s31
      %s37 = ssub.s32 %s23, %s35
      %s38 = sor.u32 %s36, %s37
      %p39 = scmp.eq.s32.totalorder %s38, 0
      %s41 = sadd.s32 %s40, 1
      %s42 = scalar_select %p39, %s40, %s41
      %p45 = pneg %p39
      %p46 = scmp.eq.s32.totalorder %s16, 1
      %p47 = por %p45, %p46
      %p48 = scmp.ne.s32.totalorder %s40, %s43
      %p49 = scmp.eq.s32.totalorder %s16, 0
      %p50 = por %p48, %p49
      %p51 = scmp.ne.s32.totalorder %s40, %s43
      %p52 = scmp.eq.s32.totalorder %s21, 1
      %p53 = por %p51, %p52
      %p54 = scmp.ne.s32.totalorder %s43, %s44
      %p55 = scmp.eq.s32.totalorder %s21, 0
      %p56 = por %p54, %p55
      %p57 = scmp.ne.s32.totalorder %s43, %s44
      %p58 = scmp.eq.s32.totalorder %s22, 1
      %p59 = por %p57, %p58
      %p61 = scmp.ne.s32.totalorder %s44, %s60
      %p62 = scmp.eq.s32.totalorder %s22, 0
      %p63 = por %p61, %p62
      %s64 = ssub.s32 %s23, %s35
      %p65 = scmp.eq.s32.totalorder %s64, 0
      %s67 = sadd.s32 %s66, 1
      %s68 = scalar_select %p65, %s66, %s67
      %p71 = pneg %p65
      %p72 = scmp.eq.s32.totalorder %s16, 1
      %p73 = por %p71, %p72
      %p74 = scmp.ne.s32.totalorder %s66, %s69
      %p75 = scmp.eq.s32.totalorder %s16, 0
      %p76 = por %p74, %p75
      %p77 = scmp.ne.s32.totalorder %s66, %s69
      %p78 = scmp.eq.s32.totalorder %s21, 1
      %p79 = por %p77, %p78
      %p80 = scmp.ne.s32.totalorder %s69, %s70
      %p81 = scmp.eq.s32.totalorder %s21, 0
      %p82 = por %p80, %p81
      %p83 = scmp.ne.s32.totalorder %s69, %s70
      %p84 = scmp.eq.s32.totalorder %s22, 1
      %p85 = por %p83, %p84
      %p87 = scmp.ne.s32.totalorder %s70, %s86
      %p88 = scmp.eq.s32.totalorder %s22, 0
      %p89 = por %p87, %p88
      %s90 = ssub.s32 %s23, %s35
      %p91 = scmp.eq.s32.totalorder %s90, 0
      %s93 = sadd.s32 %s92, 1
      %s94 = scalar_select %p91, %s92, %s93
      %p97 = pneg %p91
      %p98 = scmp.eq.s32.totalorder %s16, 1
      %p99 = por %p97, %p98
      %p100 = scmp.ne.s32.totalorder %s92, %s95
      %p101 = scmp.eq.s32.totalorder %s16, 0
      %p102 = por %p100, %p101
      %p103 = scmp.ne.s32.totalorder %s92, %s95
      %p104 = scmp.eq.s32.totalorder %s21, 1
      %p105 = por %p103, %p104
      %p106 = scmp.ne.s32.totalorder %s95, %s96
      %p107 = scmp.eq.s32.totalorder %s21, 0
      %p108 = por %p106, %p107
      %p109 = scmp.ne.s32.totalorder %s95, %s96
      %p110 = scmp.eq.s32.totalorder %s22, 1
      %p111 = por %p109, %p110
      %p113 = scmp.ne.s32.totalorder %s96, %s112
      %p114 = scmp.eq.s32.totalorder %s22, 0
      %p115 = por %p113, %p114
      %s116 = ssub.s32 %s24, %s31
      %s117 = ssub.s32 %s23, %s35
      %s118 = sor.u32 %s116, %s117
      %p119 = scmp.eq.s32.totalorder %s118, 0
      %s121 = sadd.s32 %s120, 1
      %s122 = scalar_select %p119, %s120, %s121
      %p125 = pneg %p119
      %p126 = scmp.eq.s32.totalorder %s16, 1
      %p127 = por %p125, %p126
      %p128 = scmp.ne.s32.totalorder %s120, %s123
      %p129 = scmp.eq.s32.totalorder %s16, 0
      %p130 = por %p128, %p129
      %p131 = scmp.ne.s32.totalorder %s120, %s123
      %p132 = scmp.eq.s32.totalorder %s21, 1
      %p133 = por %p131, %p132
      %p134 = scmp.ne.s32.totalorder %s123, %s124
      %p135 = scmp.eq.s32.totalorder %s21, 0
      %p136 = por %p134, %p135
      %p137 = scmp.ne.s32.totalorder %s123, %s124
      %p138 = scmp.eq.s32.totalorder %s22, 1
      %p139 = por %p137, %p138
      %p141 = scmp.ne.s32.totalorder %s124, %s140
      %p142 = scmp.eq.s32.totalorder %s22, 0
      %p143 = por %p141, %p142
      %p144 = scmp.le.s32.totalorder 1, %s16
      %p145 = scmp.lt.s32.totalorder %s16, 3
      %p146 = pnand %p144, %p145
      %p147 = pneg %p146
      // Predicated region
      $region9: #{tpu_custom_call.1} parent=5 // pred_check
        _
      $region10: #{tpu_custom_call.1} parent=5 // pred_check_branch
        %149 = sbr.rel (%p146) target = $region12
      $region11: #{tpu_custom_call.1} parent=5 // pred_region
        %s150 = ssub.s32 %s16, 1
        // Predicated region
        $region13: #{tpu_custom_call.1} parent=11 // pred_check
          %p151 = pneg %p82
        $region14: #{tpu_custom_call.1} parent=11 // pred_check_branch
          %153 = sbr.rel (%p151) target = $region16
        $region15: #{tpu_custom_call.1} parent=11 // pred_region
          %155 = vsyncadd [#allocation6], 0
          %s156 = smul.addr %s25, 8
          %s157 = scalar_lea.hbm %s1, %s156
          %s158 = sshll.u32 %s157, 4
          %s159 = int_to_ptr.hbm [resolvable:$true] %s158
          %s160 = sshll.u32 [#allocation5], 4
          %s161 = int_to_ptr.vmem [resolvable:$true] %s160
          %166 = dma.hbm_to_vmem [thread:$0]  %s159, 512, %s161, [#allocation6], 128, 128, 8
        $region16: #{tpu_custom_call.1} parent=11 // pred_fallthru
          _
        // Predicated region
        $region17: #{tpu_custom_call.1} parent=11 // pred_check
          %p167 = pneg %p108
        $region18: #{tpu_custom_call.1} parent=11 // pred_check_branch
          %169 = sbr.rel (%p167) target = $region20
        $region19: #{tpu_custom_call.1} parent=11 // pred_region
          %171 = vsyncadd [#allocation6], 0
          %s172 = smul.addr %s25, 8
          %s173 = scalar_lea.hbm %s2, %s172
          %s174 = sshll.u32 %s173, 4
          %s175 = int_to_ptr.hbm [resolvable:$true] %s174
          %s176 = sshll.u32 [#allocation7], 4
          %s177 = int_to_ptr.vmem [resolvable:$true] %s176
          %182 = dma.hbm_to_vmem [thread:$0]  %s175, 512, %s177, [#allocation6], 128, 128, 8
        $region20: #{tpu_custom_call.1} parent=11 // pred_fallthru
          _
      $region12: #{tpu_custom_call.1} parent=5 // pred_fallthru
        _
      %p183 = scmp.lt.s32.totalorder %s16, 2
      // Predicated region
      $region21: #{tpu_custom_call.1} parent=5 // pred_check
        %p184 = pneg %p183
      $region22: #{tpu_custom_call.1} parent=5 // pred_check_branch
        %186 = sbr.rel (%p184) target = $region24
      $region23: #{tpu_custom_call.1} parent=5 // pred_region
        // Predicated region
        $region25: #{tpu_custom_call.1} parent=23 // pred_check
          %p187 = pneg %p50
        $region26: #{tpu_custom_call.1} parent=23 // pred_check_branch
          %189 = sbr.rel (%p187) target = $region28
        $region27: #{tpu_custom_call.1} parent=23 // pred_region
          %s190 = sand.u32 %s40, 1
          %s191 = scalar_lea.sflag [#allocation3], %s190
          %s192 = sand.u32 %s40, 1
          %s193 = smul.addr %s192, 8
          %s194 = scalar_lea.vmem [#allocation2], %s193
          %196 = vsyncadd %s191, 0
          %s197 = sadd.s32 %s23, %s24
          %s198 = smul.addr %s197, 8
          %s199 = scalar_lea.hbm %s0, %s198
          %s201 = sshll.u32 %s199, 4
          %s202 = int_to_ptr.hbm [resolvable:$true] %s201
          %s203 = sshll.u32 %s194, 4
          %s204 = int_to_ptr.vmem [resolvable:$true] %s203
          %206 = dma.hbm_to_vmem [thread:$0]  %s202, 128, %s204, %s191
        $region28: #{tpu_custom_call.1} parent=23 // pred_fallthru
          _
      $region24: #{tpu_custom_call.1} parent=5 // pred_fallthru
        _
      %p207 = scmp.le.s32.totalorder 1, %s16
      %p208 = scmp.lt.s32.totalorder %s16, 3
      %p209 = pnand %p207, %p208
      %p210 = pneg %p209
      // Predicated region
      $region29: #{tpu_custom_call.1} parent=5 // pred_check
        _
      $region30: #{tpu_custom_call.1} parent=5 // pred_check_branch
        %212 = sbr.rel (%p209) target = $region32
      $region31: #{tpu_custom_call.1} parent=5 // pred_region
        %s213 = ssub.s32 %s16, 1
        %s214 = sand.u32 %s43, 1
        %s215 = scalar_lea.sflag [#allocation3], %s214
        %s216 = sand.u32 %s43, 1
        %s217 = smul.addr %s216, 8
        %s218 = scalar_lea.vmem [#allocation2], %s217
        // Predicated region
        $region33: #{tpu_custom_call.1} parent=31 // pred_check
          %p219 = pneg %p56
        $region34: #{tpu_custom_call.1} parent=31 // pred_check_branch
          %221 = sbr.rel (%p219) target = $region36
        $region35: #{tpu_custom_call.1} parent=31 // pred_region
          %223 = dma.done %s215, 128
        $region36: #{tpu_custom_call.1} parent=31 // pred_fallthru
          _
        // Predicated region
        $region37: #{tpu_custom_call.1} parent=31 // pred_check
          %p224 = pneg %p82
        $region38: #{tpu_custom_call.1} parent=31 // pred_check_branch
          %226 = sbr.rel (%p224) target = $region40
        $region39: #{tpu_custom_call.1} parent=31 // pred_region
          %228 = dma.done [#allocation6], 512
        $region40: #{tpu_custom_call.1} parent=31 // pred_fallthru
          _
        // Predicated region
        $region41: #{tpu_custom_call.1} parent=31 // pred_check
          %p229 = pneg %p108
        $region42: #{tpu_custom_call.1} parent=31 // pred_check_branch
          %231 = sbr.rel (%p229) target = $region44
        $region43: #{tpu_custom_call.1} parent=31 // pred_region
          %233 = dma.done [#allocation6], 512
        $region44: #{tpu_custom_call.1} parent=31 // pred_fallthru
          _
        %s234 = sand.u32 %s43, 1
        %s235 = scalar_lea.sflag [#allocation3], %s234
        %s236 = sand.u32 %s43, 1
        %s237 = smul.addr %s236, 8
        %s238 = scalar_lea.vmem [#allocation2], %s237
        %p239 = pneg %p56
        %p240 = pneg %p53
        %p241 = pneg %p82
        %p242 = pneg %p79
        %p243 = pneg %p108
        %p244 = pneg %p105
        %p245 = pneg %p136
        %p246 = pneg %p133
        %s247 = sand.u32 %s123, 1
        %s248 = scalar_lea.sflag [#allocation4], %s247
        %s249 = sand.u32 %s123, 1
        %s250 = smul.addr %s249, 8
        %s251 = scalar_lea.vmem [#allocation8], %s250
        %v252 = vld [vmem:[%s218] sm:$0x1]
        %v253 = vld [vmem:[%s218 + $0x4] sm:$0x1]
        %v254 = vld [vmem:[#allocation5] sm:$0xff]
        %v255 = vperm.slane %v252, 0
        %v256 = vmul.f32 %v255, %v254
        %v257 = vadd.f32 %v256, 0.0
        %v258 = vld [vmem:[#allocation7] sm:$0xff]
        %v259 = vperm.slane %v253, 0
        %v260 = vmul.f32 %v259, %v258
        %v261 = vadd.f32 %v257, %v260
        %v262 = vld [vmem:[%s218 + $0x1] sm:$0x1]
        %v263 = vld [vmem:[%s218 + $0x5] sm:$0x1]
        %s264 = scalar_lea.vmem [#allocation5], 8
        %v265 = vld [vmem:[%s264] sm:$0xff]
        %v266 = vperm.slane %v262, 0
        %v267 = vmul.f32 %v266, %v265
        %v268 = vadd.f32 %v261, %v267
        %s269 = scalar_lea.vmem [#allocation7], 8
        %v270 = vld [vmem:[%s269] sm:$0xff]
        %v271 = vperm.slane %v263, 0
        %v272 = vmul.f32 %v271, %v270
        %v273 = vadd.f32 %v268, %v272
        %v274 = vld [vmem:[%s218 + $0x2] sm:$0x1]
        %v275 = vld [vmem:[%s218 + $0x6] sm:$0x1]
        %s276 = scalar_lea.vmem [#allocation5], 16
        %v277 = vld [vmem:[%s276] sm:$0xff]
        %v278 = vperm.slane %v274, 0
        %v279 = vmul.f32 %v278, %v277
        %v280 = vadd.f32 %v273, %v279
        %s281 = scalar_lea.vmem [#allocation7], 16
        %v282 = vld [vmem:[%s281] sm:$0xff]
        %v283 = vperm.slane %v275, 0
        %v284 = vmul.f32 %v283, %v282
        %v285 = vadd.f32 %v280, %v284
        %v286 = vld [vmem:[%s218 + $0x3] sm:$0x1]
        %v287 = vld [vmem:[%s218 + $0x7] sm:$0x1]
        %s288 = scalar_lea.vmem [#allocation5], 24
        %v289 = vld [vmem:[%s288] sm:$0xff]
        %v290 = vperm.slane %v286, 0
        %v291 = vmul.f32 %v290, %v289
        %v292 = vadd.f32 %v285, %v291
        %s293 = scalar_lea.vmem [#allocation7], 24
        %v294 = vld [vmem:[%s293] sm:$0xff]
        %v295 = vperm.slane %v287, 0
        %v296 = vmul.f32 %v295, %v294
        %v297 = vadd.f32 %v292, %v296
        %298 = vst [vmem:[%s251] sm:$0xff] %v297
        %s299 = sand.u32 %s123, 1
        %s300 = scalar_lea.sflag [#allocation4], %s299
        %s301 = sand.u32 %s123, 1
        %s302 = smul.addr %s301, 8
        %s303 = scalar_lea.vmem [#allocation8], %s302
        // Predicated region
        $region45: #{tpu_custom_call.1} parent=31 // pred_check
          %p304 = pneg %p133
        $region46: #{tpu_custom_call.1} parent=31 // pred_check_branch
          %306 = sbr.rel (%p304) target = $region48
        $region47: #{tpu_custom_call.1} parent=31 // pred_region
          %308 = vsyncadd %s300, 0
          %s309 = sadd.s32 %s25, %s26
          %s310 = smul.addr %s309, 8
          %s311 = scalar_lea.hbm %s3, %s310
          %s313 = sshll.u32 %s303, 4
          %s314 = int_to_ptr.vmem [resolvable:$true] %s313
          %s315 = sshll.u32 %s311, 4
          %s316 = int_to_ptr.hbm [resolvable:$true] %s315
          %318 = dma.vmem_to_hbm [thread:$0]  %s314, 128, %s316, %s300
        $region48: #{tpu_custom_call.1} parent=31 // pred_fallthru
          _
      $region32: #{tpu_custom_call.1} parent=5 // pred_fallthru
        _
      %p319 = scmp.le.s32.totalorder 2, %s16
      // Predicated region
      $region49: #{tpu_custom_call.1} parent=5 // pred_check
        %p320 = pneg %p319
      $region50: #{tpu_custom_call.1} parent=5 // pred_check_branch
        %322 = sbr.rel (%p320) target = $region52
      $region51: #{tpu_custom_call.1} parent=5 // pred_region
        %s323 = ssub.s32 %s16, 2
        // Predicated region
        $region53: #{tpu_custom_call.1} parent=51 // pred_check
          %p324 = pneg %p139
        $region54: #{tpu_custom_call.1} parent=51 // pred_check_branch
          %326 = sbr.rel (%p324) target = $region56
        $region55: #{tpu_custom_call.1} parent=51 // pred_region
          %s327 = sand.u32 %s124, 1
          %s328 = scalar_lea.sflag [#allocation4], %s327
          %s329 = sand.u32 %s124, 1
          %s330 = smul.addr %s329, 8
          %s331 = scalar_lea.vmem [#allocation8], %s330
          %333 = dma.done %s328, 128
        $region56: #{tpu_custom_call.1} parent=51 // pred_fallthru
          _
      $region52: #{tpu_custom_call.1} parent=5 // pred_fallthru
        _
    $region6: #{tpu_custom_call.1} parent=1 // loop_footer
      %s20 = sadd.s32 1, %s16
    $region7: #{tpu_custom_call.1} parent=1 // loop_footer_branch
      %15 = sbr.rel target = $region3
    $region8: #{tpu_custom_call.1} parent=1 // loop_exit
      _
    %334 = vsyncpa [#allocation3], 1
    %s335 = scalar_lea.sflag [#allocation3], 1
    %336 = vsyncpa %s335, 1
    %337 = vsyncpa [#allocation6], 1
    %338 = vsyncpa [#allocation4], 1
    %s339 = scalar_lea.sflag [#allocation4], 1
    %340 = vsyncpa %s339, 1

</llo_original>
